<compile_context>
chip_gen: v6e
topology: v6e:2x2x1
jax: 0.10.0
libtpu: 0.0.40
codegen_flags: <defaults>
</compile_context>

<pallas_src>
import functools
import math

import jax
import jax.numpy as jnp
from jax.experimental import pallas as pl
from jax.experimental.pallas import tpu as pltpu


def _fuzzy_hist_kernel(v_ref, bins_ref, out_ref, *, inv_sigma):
    # v_ref:    (block_t, 1)  scalar values on the sublane axis.
    # bins_ref: (1, length)   bin centers on the lane axis (resident block).
    # out_ref:  (block_t, length)
    v = v_ref[...].astype(jnp.float32)       # (bt, 1)
    b = bins_ref[...].astype(jnp.float32)    # (1, L)
    z = (v - b) * inv_sigma                  # outer broadcast -> (bt, L)
    out_ref[...] = jnp.exp(-0.25 * (z * z)).astype(out_ref.dtype)


def _round_up(x, m):
    return ((x + m - 1) // m) * m


def _fuzzy_hist_core(values_flat, bins_2d, inv_sigma, block_t):
    """values_flat: (T, 1), bins_2d: (1, L) -> (T, L)."""
    t = values_flat.shape[0]
    length = bins_2d.shape[1]

    # Row-block sizing:
    #   * cap by a ~8 MiB VMEM budget for the (double-buffered) output tile,
    #   * cap by block_t,
    #   * keep >= 2 grid steps (when possible) so the "parallel" axis can be
    #     sharded across the 2 TensorCores on v7x,
    #   * keep it a multiple of 8 (sublane) -- the ragged tail is clipped by
    #     Pallas automatically.
    vmem_budget = 8 * 1024 * 1024
    rows_by_vmem = max(8, vmem_budget // max(1, length * 4 * 2))
    bt = min(block_t, rows_by_vmem, _round_up(max(pl.cdiv(t, 2), 1), 8))
    bt = max(8, (bt // 8) * 8)
    grid = (pl.cdiv(t, bt),)

    kernel = functools.partial(_fuzzy_hist_kernel, inv_sigma=inv_sigma)
    return pl.pallas_call(
        kernel,
        out_shape=jax.ShapeDtypeStruct((t, length), values_flat.dtype),
        grid=grid,
        in_specs=[
            pl.BlockSpec((bt, 1), lambda i: (i, 0)),        # values tile
            pl.BlockSpec((1, length), lambda i: (0, 0)),    # bins, resident
        ],
        out_specs=pl.BlockSpec((bt, length), lambda i: (i, 0)),
        compiler_params=pltpu.CompilerParams(
            dimension_semantics=("parallel",),
        ),
    )(values_flat, bins_2d)


class FuzzyHistogram:
    """Pallas-TPU port of the FuzzyHistogram forward pass."""

    def __init__(self, length, vmin, vmax, *, block_t=2048, dtype=jnp.float32):
        err_msg = "The value of 'length' must be a positive integer."
        if not isinstance(length, int) or length <= 0:
            raise ValueError(err_msg)
        if not (isinstance(vmin, (int, float)) and isinstance(vmax, (int, float))):
            raise ValueError("The values of 'vmin' and 'vmax' must be floating point numbers.")
        if vmin >= vmax:
            raise ValueError("The value of 'vmin' must be less than the value of 'vmax.'")
        self.length = length
        self.vmin = float(vmin)
        self.vmax = float(vmax)
        self.sigma = (self.vmax - self.vmin) / length
        self.bins = jnp.linspace(self.vmin, self.vmax, length, dtype=dtype)
        self.block_t = block_t

    def __call__(self, values):
        # TODO(synk): the PyTorch module issues a host-side warnings.warn when
        # values fall outside [vmin, vmax]; that data-dependent Python side
        # effect has no in-kernel equivalent and is intentionally omitted.
        values = jnp.asarray(values)
        if values.shape[-1] != 1:
            values = values[..., None]
        lead_shape = values.shape[:-1]
        if len(lead_shape) < 1:
            raise ValueError("FuzzyHistogram expects at least a 1-D input.")
        t = int(math.prod(lead_shape))

        flat = values.reshape(t, 1)                      # free, contiguous view
        bins_2d = self.bins.reshape(1, self.length).astype(flat.dtype)

        histo_flat = _fuzzy_hist_core(flat, bins_2d, 1.0 / self.sigma, self.block_t)
        histo = histo_flat.reshape(*lead_shape, self.length)

        # torch.flatten(histo, end_dim=1): merge the first two dims.
        merged = (histo.shape[0] * histo.shape[1],) + histo.shape[2:]
        return histo.reshape(merged)


if __name__ == "__main__":
    key = jax.random.PRNGKey(0)
    n_atoms, n_feat = 8, 4
    length, vmin, vmax = 128, -2.0, 2.0

    # Deterministic in-range example input.
    values = jax.random.uniform(
        key, (n_atoms, n_feat), dtype=jnp.float32, minval=vmin, maxval=vmax
    )

    fh = FuzzyHistogram(length, vmin, vmax)
    out = fh(values)
    out = jax.block_until_ready(out)

    # Pure-JAX reference with exact PyTorch semantics.
    bins = jnp.linspace(vmin, vmax, length, dtype=jnp.float32)
    sigma = (vmax - vmin) / length
    x = values[..., None] - bins
    ref = jnp.exp(-((x / sigma) ** 2) / 4)
    ref = ref.reshape(n_atoms * n_feat, length)

    assert out.shape == (n_atoms * n_feat, length), out.shape
    assert out.dtype == values.dtype
    assert jnp.allclose(out, ref, rtol=1e-5, atol=1e-6), "mismatch vs reference"
    print("KERNEL_OK")
</pallas_src>

<mosaic_0001>
module attributes {stable_mosaic.version = 11 : i64} {
  func.func @_fuzzy_hist_kernel(%arg0: i32, %arg1: memref<16x1xf32, #tpu.memory_space<vmem>>, %arg2: memref<1x128xf32, #tpu.memory_space<vmem>>, %arg3: memref<16x128xf32, #tpu.memory_space<vmem>>) attributes {dimension_semantics = [#tpu.dimension_semantics<parallel>], iteration_bounds = array<i64: 2>, scalar_prefetch = 0 : i64, scratch_operands = 0 : i64, tpu.core_type = #tpu.core_type<tc>, window_params = [{transform_indices = @transform_0, window_bounds = array<i64: 16, 1>}, {pipeline_mode = #tpu.pipeline_mode<synchronous>, transform_indices = @transform_1, window_bounds = array<i64: 1, 128>}, {transform_indices = @transform_2, window_bounds = array<i64: 16, 128>}]} {
    %c0 = arith.constant 0 : index
    %c0_0 = arith.constant 0 : index
    %0 = vector.load %arg1[%c0, %c0_0] : memref<16x1xf32, #tpu.memory_space<vmem>>, vector<16x1xf32>
    %c0_1 = arith.constant 0 : index
    %c0_2 = arith.constant 0 : index
    %1 = vector.load %arg2[%c0_1, %c0_2] : memref<1x128xf32, #tpu.memory_space<vmem>>, vector<1x128xf32>
    %2 = vector.broadcast %0 : vector<16x1xf32> to vector<16x128xf32>
    %3 = vector.broadcast %1 : vector<1x128xf32> to vector<16x128xf32>
    %4 = arith.subf %2, %3 : vector<16x128xf32>
    %cst = arith.constant 3.200000e+01 : f32
    %5 = vector.broadcast %cst : f32 to vector<16x128xf32>
    %6 = arith.mulf %4, %5 : vector<16x128xf32>
    %7 = arith.mulf %6, %6 : vector<16x128xf32>
    %cst_3 = arith.constant -2.500000e-01 : f32
    %8 = vector.broadcast %cst_3 : f32 to vector<16x128xf32>
    %9 = arith.mulf %8, %7 : vector<16x128xf32>
    %10 = math.exp %9 : vector<16x128xf32>
    %c0_4 = arith.constant 0 : index
    %c0_5 = arith.constant 0 : index
    %11 = vector.load %arg3[%c0_4, %c0_5] : memref<16x128xf32, #tpu.memory_space<vmem>>, vector<16x128xf32>
    tpu.vector_store %arg3[%c0_4, %c0_5], %10 {strides = array<i32>} : memref<16x128xf32, #tpu.memory_space<vmem>>, vector<16x128xf32>,
    return
  }
  func.func @transform_0(%arg0: i32) -> (i32, i32) {
    %c0_i32 = arith.constant 0 : i32
    %c0_i32_0 = arith.constant 0 : i32
    return %arg0, %c0_i32 : i32, i32
  }
  func.func @transform_1(%arg0: i32) -> (i32, i32) {
    %c0_i32 = arith.constant 0 : i32
    %c0_i32_0 = arith.constant 0 : i32
    %c0_i32_1 = arith.constant 0 : i32
    return %c0_i32, %c0_i32_0 : i32, i32
  }
  func.func @transform_2(%arg0: i32) -> (i32, i32) {
    %c0_i32 = arith.constant 0 : i32
    %c0_i32_0 = arith.constant 0 : i32
    return %arg0, %c0_i32 : i32, i32
  }
}

</mosaic_0001>

<llo_original>
// kernel: tpu_custom_call.1
$region0: #{tpu_custom_call.1}
  #allocation0 [shape = 'u32[]', space=smem, size = 0x4, offset = 0x4, fixed_abs, tag = 'smem constant byte address 0x4 - core index']
  #allocation1 [shape = 'u32[144,128]{1,0:T(1,128)}', space=vmem, size = 0x12000, scoped, tag = 'internal scratch']
  %s0 = inlined_call_operand.vmem [shape: f32[32,1], index: 0, kind: input, shape index: {}]
  %s1 = inlined_call_operand.vmem [shape: f32[1,128], index: 1, kind: input, shape index: {}]
  %s2 = inlined_call_operand.hbm [shape: f32[32,128], index: 2, kind: output, shape index: {}]
  %s3 = sld [smem:[#allocation0]]
  $region41: #{tpu_custom_call.1} parent=0
    _
  %s5 = ssub.s32 1, %s3
  %s6 = scalar_select 0, %s5, %s3
  $region1: #{tpu_custom_call.1} parent=0
    #allocation2 [shape = 'u8[16384]{0}', space=vmem, size = 0x4000, scoped, tag = 'output window, operand 0']
    #allocation3 [shape = 's32[2]{0}', space=sflag, size = 0x8, scoped, tag = 'scoped memory for tpu_custom_call.1']
    %7 = vsyncpa [#allocation3], 0
    %s8 = scalar_lea.sflag [#allocation3], 1
    %9 = vsyncpa %s8, 0
    loop: start=0, step=1, limit=4
    $region2: #{tpu_custom_call.1} parent=1 // loop_pre_header
      _
    $region3: #{tpu_custom_call.1} parent=1 // loop_header
      %s11 = sphi 0, %s15
      %p12 = scmp.ge.s32.totalorder %s11, 4
      %s21 = sphi 0, %s23
      %s24 = sphi 0, %s21
      %s25 = sphi 0, %s24
      %s41 = sphi 0, %s25
      %s45 = sphi 0, %s45
      %s47 = sphi 0, %s45
      %s48 = sphi 0, %s47
      %s62 = sphi 0, %s48
      %s68 = sphi 0, %s70
      %s71 = sphi 0, %s68
      %s72 = sphi 0, %s71
      %s88 = sphi 0, %s72
    $region4: #{tpu_custom_call.1} parent=1 // loop_header_branch
      %14 = sbr.rel (%p12) target = $region8
    $region5: #{tpu_custom_call.1} parent=1 // loop_body
      %s16 = ssub.s32 %s11, 1
      %s17 = ssub.s32 %s11, 2
      %s18 = sadd.s32 %s11, 1
      %s19 = ssub.s32 %s11, %s18
      %p20 = scmp.eq.s32.totalorder %s19, 0
      %s22 = sadd.s32 %s21, 1
      %s23 = scalar_select %p20, %s21, %s22
      %p26 = pneg %p20
      %p27 = scmp.eq.s32.totalorder %s11, 1
      %p28 = por %p26, %p27
      %p29 = scmp.ne.s32.totalorder %s21, %s24
      %p30 = scmp.eq.s32.totalorder %s11, 0
      %p31 = por %p29, %p30
      %p32 = scmp.ne.s32.totalorder %s21, %s24
      %p33 = scmp.eq.s32.totalorder %s16, 1
      %p34 = por %p32, %p33
      %p35 = scmp.ne.s32.totalorder %s24, %s25
      %p36 = scmp.eq.s32.totalorder %s16, 0
      %p37 = por %p35, %p36
      %p38 = scmp.ne.s32.totalorder %s24, %s25
      %p39 = scmp.eq.s32.totalorder %s17, 1
      %p40 = por %p38, %p39
      %p42 = scmp.ne.s32.totalorder %s25, %s41
      %p43 = scmp.eq.s32.totalorder %s17, 0
      %p44 = por %p42, %p43
      %s46 = sadd.s32 %s45, 1
      %p49 = scmp.eq.s32.totalorder %s11, 1
      %p50 = scmp.ne.s32.totalorder %s45, %s47
      %p51 = scmp.eq.s32.totalorder %s11, 0
      %p52 = por %p50, %p51
      %p53 = scmp.ne.s32.totalorder %s45, %s47
      %p54 = scmp.eq.s32.totalorder %s16, 1
      %p55 = por %p53, %p54
      %p56 = scmp.ne.s32.totalorder %s47, %s48
      %p57 = scmp.eq.s32.totalorder %s16, 0
      %p58 = por %p56, %p57
      %p59 = scmp.ne.s32.totalorder %s47, %s48
      %p60 = scmp.eq.s32.totalorder %s17, 1
      %p61 = por %p59, %p60
      %p63 = scmp.ne.s32.totalorder %s48, %s62
      %p64 = scmp.eq.s32.totalorder %s17, 0
      %p65 = por %p63, %p64
      %s66 = ssub.s32 %s11, %s18
      %p67 = scmp.eq.s32.totalorder %s66, 0
      %s69 = sadd.s32 %s68, 1
      %s70 = scalar_select %p67, %s68, %s69
      %p73 = pneg %p67
      %p74 = scmp.eq.s32.totalorder %s11, 1
      %p75 = por %p73, %p74
      %p76 = scmp.ne.s32.totalorder %s68, %s71
      %p77 = scmp.eq.s32.totalorder %s11, 0
      %p78 = por %p76, %p77
      %p79 = scmp.ne.s32.totalorder %s68, %s71
      %p80 = scmp.eq.s32.totalorder %s16, 1
      %p81 = por %p79, %p80
      %p82 = scmp.ne.s32.totalorder %s71, %s72
      %p83 = scmp.eq.s32.totalorder %s16, 0
      %p84 = por %p82, %p83
      %p85 = scmp.ne.s32.totalorder %s71, %s72
      %p86 = scmp.eq.s32.totalorder %s17, 1
      %p87 = por %p85, %p86
      %p89 = scmp.ne.s32.totalorder %s72, %s88
      %p90 = scmp.eq.s32.totalorder %s17, 0
      %p91 = por %p89, %p90
      %p92 = scmp.le.s32.totalorder 1, %s11
      %p93 = scmp.lt.s32.totalorder %s11, 3
      %p94 = pnand %p92, %p93
      %p95 = pneg %p94
      // Predicated region
      $region9: #{tpu_custom_call.1} parent=5 // pred_check
        _
      $region10: #{tpu_custom_call.1} parent=5 // pred_check_branch
        %97 = sbr.rel (%p94) target = $region12
      $region11: #{tpu_custom_call.1} parent=5 // pred_region
        %s98 = ssub.s32 %s11, 1
        // Predicated region
        $region13: #{tpu_custom_call.1} parent=11 // pred_check
          %p99 = pneg %p58
        $region14: #{tpu_custom_call.1} parent=11 // pred_check_branch
          %101 = sbr.rel (%p99) target = $region16
        $region15: #{tpu_custom_call.1} parent=11 // pred_region
          _
        $region16: #{tpu_custom_call.1} parent=11 // pred_fallthru
          _
      $region12: #{tpu_custom_call.1} parent=5 // pred_fallthru
        _
      %p102 = scmp.lt.s32.totalorder %s11, 2
      // Predicated region
      $region17: #{tpu_custom_call.1} parent=5 // pred_check
        %p103 = pneg %p102
      $region18: #{tpu_custom_call.1} parent=5 // pred_check_branch
        %105 = sbr.rel (%p103) target = $region20
      $region19: #{tpu_custom_call.1} parent=5 // pred_region
        // Predicated region
        $region21: #{tpu_custom_call.1} parent=19 // pred_check
          %p106 = pneg %p31
        $region22: #{tpu_custom_call.1} parent=19 // pred_check_branch
          %108 = sbr.rel (%p106) target = $region24
        $region23: #{tpu_custom_call.1} parent=19 // pred_region
          %s109 = smul.u32 2, %s11
          %p110 = scmp.lt.s32.totalorder %s109, 3
          %s111 = scalar_select %p110, %s109, 3
          %s112 = smul.addr %s111, 8
          %s113 = scalar_lea.vmem %s0, %s112
          %s114 = smul.u32 2, %s11
        $region24: #{tpu_custom_call.1} parent=19 // pred_fallthru
          _
      $region20: #{tpu_custom_call.1} parent=5 // pred_fallthru
        _
      %p115 = scmp.le.s32.totalorder 1, %s11
      %p116 = scmp.lt.s32.totalorder %s11, 3
      %p117 = pnand %p115, %p116
      %p118 = pneg %p117
      // Predicated region
      $region25: #{tpu_custom_call.1} parent=5 // pred_check
        _
      $region26: #{tpu_custom_call.1} parent=5 // pred_check_branch
        %120 = sbr.rel (%p117) target = $region28
      $region27: #{tpu_custom_call.1} parent=5 // pred_region
        %s121 = ssub.s32 %s11, 1
        %s122 = smul.u32 2, %s16
        %p123 = scmp.lt.s32.totalorder %s122, 3
        %s124 = scalar_select %p123, %s122, 3
        %s125 = smul.addr %s124, 8
        %s126 = scalar_lea.vmem %s0, %s125
        %p127 = pneg %p37
        %p128 = pneg %p34
        %p129 = pneg %p58
        %p130 = pneg %p55
        %p131 = pneg %p84
        %p132 = pneg %p81
        %s133 = sand.u32 %s71, 1
        %s134 = scalar_lea.sflag [#allocation3], %s133
        %s135 = sand.u32 %s71, 1
        %s136 = smul.addr %s135, 16
        %s137 = scalar_lea.vmem [#allocation2], %s136
        %s138 = smul.u32 2, %s16
        %p139 = scmp.lt.s32.totalorder %s138, 3
        %s140 = scalar_select %p139, %s138, 3
        %s141 = smul.addr %s140, 8
        %s142 = scalar_lea.vmem %s0, %s141
        %s143 = smul.u32 2, %s16
        %s144 = smul.u32 2, %s16
        %v145 = vld [vmem:[%s142] sm:$0xff]
        %v146 = vld [vmem:[%s142 + $0x8] sm:$0xff]
        %v147 = vld [vmem:[%s1] sm:$0x1]
        %149 = vset.pattern.permute.xlu0 0
        %150 = vperm.xlu0 %149, %v145
        %v151 = vpop.permute.xlu0 %150
        %154 = vset.pattern.permute.xlu0 0
        %155 = vperm.xlu0 %154, %v146
        %v156 = vpop.permute.xlu0 %155
        %v159 = vlaneseq
        %v160 = vshrl.u32 %v159, 7
        %v161 = vsub.s32 0, %v160
        %v162 = vrot.slane %v147, %v161
        %v164 = vsub.f32 %v151, %v162
        %v165 = vsub.f32 %v156, %v162
        %v166 = vmul.f32 %v164, 32.0
        %v167 = vmul.f32 %v165, 32.0
        %v168 = vmul.f32 %v166, %v166
        %v169 = vmul.f32 %v167, %v167
        %v170 = vmul.f32 %v168, -0.25
        %v171 = vmul.f32 %v169, -0.25
        %v172 = vmul.f32 %v170, 1.442695
        %v173 = vpow.pop %v172
        %v174 = vmul.f32 %v171, 1.442695
        %v175 = vpow.pop %v174
        %176 = vst [vmem:[%s137] sm:$0xff] %v173
        %177 = vst [vmem:[%s137 + $0x8] sm:$0xff] %v175
        %s178 = sand.u32 %s71, 1
        %s179 = scalar_lea.sflag [#allocation3], %s178
        %s180 = sand.u32 %s71, 1
        %s181 = smul.addr %s180, 16
        %s182 = scalar_lea.vmem [#allocation2], %s181
        // Predicated region
        $region29: #{tpu_custom_call.1} parent=27 // pred_check
          %p183 = pneg %p81
        $region30: #{tpu_custom_call.1} parent=27 // pred_check_branch
          %185 = sbr.rel (%p183) target = $region32
        $region31: #{tpu_custom_call.1} parent=27 // pred_region
          %s186 = smul.u32 2, %s16
          %s188 = ssub.s32 256, 256
          %189 = vsyncadd %s179, %s188
          %s190 = smul.addr %s186, 128
          %s191 = scalar_lea.hbm %s2, %s190
          %s192 = sshll.u32 %s182, 4
          %s193 = int_to_ptr.vmem [resolvable:$true] %s192
          %198 = dma.vmem_to_hbm [thread:$0]  %s193, 256, %s191, %s179, 128, 128, 8
        $region32: #{tpu_custom_call.1} parent=27 // pred_fallthru
          _
      $region28: #{tpu_custom_call.1} parent=5 // pred_fallthru
        _
      %p199 = scmp.le.s32.totalorder 2, %s11
      // Predicated region
      $region33: #{tpu_custom_call.1} parent=5 // pred_check
        %p200 = pneg %p199
      $region34: #{tpu_custom_call.1} parent=5 // pred_check_branch
        %202 = sbr.rel (%p200) target = $region36
      $region35: #{tpu_custom_call.1} parent=5 // pred_region
        %s203 = ssub.s32 %s11, 2
        // Predicated region
        $region37: #{tpu_custom_call.1} parent=35 // pred_check
          %p204 = pneg %p87
        $region38: #{tpu_custom_call.1} parent=35 // pred_check_branch
          %206 = sbr.rel (%p204) target = $region40
        $region39: #{tpu_custom_call.1} parent=35 // pred_region
          %s207 = sand.u32 %s72, 1
          %s208 = scalar_lea.sflag [#allocation3], %s207
          %s209 = sand.u32 %s72, 1
          %s210 = smul.addr %s209, 16
          %s211 = scalar_lea.vmem [#allocation2], %s210
          %212 = dma.done %s208, 256
        $region40: #{tpu_custom_call.1} parent=35 // pred_fallthru
          _
      $region36: #{tpu_custom_call.1} parent=5 // pred_fallthru
        _
    $region6: #{tpu_custom_call.1} parent=1 // loop_footer
      %s15 = sadd.s32 1, %s11
    $region7: #{tpu_custom_call.1} parent=1 // loop_footer_branch
      %10 = sbr.rel target = $region3
    $region8: #{tpu_custom_call.1} parent=1 // loop_exit
      _
    %213 = vsyncpa [#allocation3], 1
    %s214 = scalar_lea.sflag [#allocation3], 1
    %215 = vsyncpa %s214, 1

</llo_original>
